<compile_context>
chip_gen: v6e
topology: v6e:2x2x1
jax: 0.10.0
libtpu: 0.0.40
codegen_flags: <defaults>
</compile_context>

<pallas_src>
import functools

import jax
import jax.numpy as jnp
from jax.experimental import pallas as pl
from jax.experimental.pallas import tpu as pltpu


def _round_up(v, m):
    return (v + m - 1) // m * m


def _se_scale_kernel(x_ref, w1_ref, b1_ref, w2_ref, b2_ref, o_ref, acc_ref, *, inv_hw):
    # x_ref : (B, C, T_HW)  one (batch-tile, HW-tile) block of the input
    # w1_ref: (C, R), b1_ref: (1, R)
    # w2_ref: (R, C), b2_ref: (1, C)
    # o_ref : (B, C)        dense output slab
    # acc_ref: (B, C) f32   pooled-sum accumulator (persists across HW steps)
    hw_step = pl.program_id(1)

    @pl.when(hw_step == 0)
    def _init():
        acc_ref[...] = jnp.zeros_like(acc_ref)

    # Partial channel sums for this HW tile, accumulated in f32.
    acc_ref[...] += jnp.sum(x_ref[...].astype(jnp.float32), axis=-1)

    @pl.when(hw_step == pl.num_programs(1) - 1)
    def _finalize():
        pooled = acc_ref[...] * inv_hw                                   # (B, C)
        h = jnp.dot(pooled, w1_ref[...].astype(jnp.float32),
                    preferred_element_type=jnp.float32) + b1_ref[...]
        h = jnp.maximum(h, 0.0)                                          # relu (B, R)
        s = jnp.dot(h, w2_ref[...].astype(jnp.float32),
                    preferred_element_type=jnp.float32) + b2_ref[...]
        o_ref[...] = jax.nn.sigmoid(s).astype(o_ref.dtype)               # (B, C)


def se_scale(x, w1, b1, w2, b2, *, b_tile=None, hw_tile=None,
             hw_tile_cap=2048, b_tile_cap=64,
             vmem_limit_bytes=64 * 1024 * 1024):
    """x: (N, C, H, W); w1: (R, C); b1: (R,); w2: (C, R); b2: (C,).

    Returns (N, C, 1, 1), matching SEScale.forward.
    """
    N, C, H, W = x.shape
    R = w1.shape[0]
    HW = H * W
    itemsize = int(jnp.dtype(x.dtype).itemsize)

    # --- HW tile: lane axis, multiple of 128 unless it is the full extent ---
    if hw_tile is None:
        if HW <= hw_tile_cap:
            hw_tile = HW
        else:
            n_hw_steps = pl.cdiv(HW, hw_tile_cap)
            hw_tile = _round_up(pl.cdiv(HW, n_hw_steps), 128)
    hw_pad = _round_up(HW, hw_tile)

    # --- batch tile: cap by VMEM budget (~6 MiB per x buffer, double-buffered) ---
    if b_tile is None:
        per_buf_budget = 6 * 1024 * 1024
        b_by_vmem = max(1, per_buf_budget // (C * hw_tile * itemsize))
        cand = min(N, b_tile_cap, b_by_vmem)
        if cand >= N:
            b_tile = N                      # block == full dim -> always legal
        else:
            b_tile = max(8, (cand // 8) * 8)  # sublane-aligned batch tile
    n_pad = _round_up(N, b_tile)

    # Flatten spatial dims; zero-pad (zeros don't change the sum, we divide by true HW).
    x_flat = x.reshape(N, C, HW)
    if hw_pad != HW or n_pad != N:
        x_flat = jnp.pad(x_flat, ((0, n_pad - N), (0, 0), (0, hw_pad - HW)))

    w1_t = w1.T.astype(jnp.float32)           # (C, R): pooled @ w1_t
    w2_t = w2.T.astype(jnp.float32)           # (R, C)
    b1_2d = b1.reshape(1, R).astype(jnp.float32)
    b2_2d = b2.reshape(1, C).astype(jnp.float32)

    grid = (n_pad // b_tile, hw_pad // hw_tile)
    kernel = functools.partial(_se_scale_kernel, inv_hw=float(1.0 / HW))

    out = pl.pallas_call(
        kernel,
        out_shape=jax.ShapeDtypeStruct((n_pad, C), x.dtype),
        grid_spec=pltpu.PrefetchScalarGridSpec(
            num_scalar_prefetch=0,
            grid=grid,
            in_specs=[
                pl.BlockSpec((b_tile, C, hw_tile), lambda b, h: (b, 0, h)),
                pl.BlockSpec((C, R), lambda b, h: (0, 0)),
                pl.BlockSpec((1, R), lambda b, h: (0, 0)),
                pl.BlockSpec((R, C), lambda b, h: (0, 0)),
                pl.BlockSpec((1, C), lambda b, h: (0, 0)),
            ],
            out_specs=pl.BlockSpec((b_tile, C), lambda b, h: (b, 0)),
            scratch_shapes=[pltpu.VMEM((b_tile, C), jnp.float32)],
        ),
        compiler_params=pltpu.CompilerParams(
            dimension_semantics=("parallel", "arbitrary"),
            vmem_limit_bytes=vmem_limit_bytes,
        ),
    )(x_flat, w1_t, b1_2d, w2_t, b2_2d)

    return out[:N].reshape(N, C, 1, 1)


def se_scale_ref(x, w1, b1, w2, b2):
    pooled = jnp.mean(x, axis=(2, 3))                         # (N, C)
    h = jnp.maximum(pooled @ w1.T + b1, 0.0)                  # (N, R)
    s = jax.nn.sigmoid(h @ w2.T + b2)                         # (N, C)
    return s[:, :, None, None]


if __name__ == "__main__":
    key = jax.random.PRNGKey(0)

    # SEScale(channel=32, reduction=16): N=2, 16x16 feature map.
    N, C, H, W = 2, 32, 16, 16
    R = 16
    k_x, k_w1, k_b1, k_w2, k_b2, k_x2 = jax.random.split(key, 6)
    x = jax.random.normal(k_x, (N, C, H, W), dtype=jnp.float32)
    # synthetic parameters, shapes from nn.Conv2d(C,R,1) / nn.Conv2d(R,C,1)
    w1 = jax.random.normal(k_w1, (R, C), dtype=jnp.float32) * 0.1
    b1 = jax.random.normal(k_b1, (R,), dtype=jnp.float32) * 0.1
    w2 = jax.random.normal(k_w2, (C, R), dtype=jnp.float32) * 0.1
    b2 = jax.random.normal(k_b2, (C,), dtype=jnp.float32) * 0.1

    y = jax.block_until_ready(se_scale(x, w1, b1, w2, b2))
    y_ref = se_scale_ref(x, w1, b1, w2, b2)
    assert y.shape == (N, C, 1, 1)
    assert jnp.allclose(y, y_ref, atol=1e-5, rtol=1e-5), "mismatch vs reference (case 1)"

    # Second case exercises the tiled-HW accumulation + zero-padding path.
    N2, H2, W2 = 3, 20, 20                                    # HW = 400 > cap=256
    x2 = jax.random.normal(k_x2, (N2, C, H2, W2), dtype=jnp.float32)
    y2 = jax.block_until_ready(se_scale(x2, w1, b1, w2, b2, hw_tile_cap=256))
    y2_ref = se_scale_ref(x2, w1, b1, w2, b2)
    assert y2.shape == (N2, C, 1, 1)
    assert jnp.allclose(y2, y2_ref, atol=1e-5, rtol=1e-5), "mismatch vs reference (case 2)"

    print("KERNEL_OK")
</pallas_src>

<mosaic_0001>
module attributes {stable_mosaic.version = 11 : i64} {
  func.func @_se_scale_kernel(%arg0: i32, %arg1: i32, %arg2: memref<2x32x256xf32, #tpu.memory_space<vmem>>, %arg3: memref<32x16xf32, #tpu.memory_space<vmem>>, %arg4: memref<1x16xf32, #tpu.memory_space<vmem>>, %arg5: memref<16x32xf32, #tpu.memory_space<vmem>>, %arg6: memref<1x32xf32, #tpu.memory_space<vmem>>, %arg7: memref<2x32xf32, #tpu.memory_space<vmem>>, %arg8: memref<2x32xf32, #tpu.memory_space<vmem>>) attributes {dimension_semantics = [#tpu.dimension_semantics<parallel>, #tpu.dimension_semantics<arbitrary>], iteration_bounds = array<i64: 1, 1>, scalar_prefetch = 0 : i64, scratch_operands = 1 : i64, tpu.core_type = #tpu.core_type<tc>, window_params = [{transform_indices = @transform_0, window_bounds = array<i64: 2, 32, 256>}, {pipeline_mode = #tpu.pipeline_mode<synchronous>, transform_indices = @transform_1, window_bounds = array<i64: 32, 16>}, {pipeline_mode = #tpu.pipeline_mode<synchronous>, transform_indices = @transform_2, window_bounds = array<i64: 1, 16>}, {pipeline_mode = #tpu.pipeline_mode<synchronous>, transform_indices = @transform_3, window_bounds = array<i64: 16, 32>}, {pipeline_mode = #tpu.pipeline_mode<synchronous>, transform_indices = @transform_4, window_bounds = array<i64: 1, 32>}, {transform_indices = @transform_5, window_bounds = array<i64: 2, 32>}]} {
    %c0_i32 = arith.constant 0 : i32
    %0 = arith.cmpi eq, %arg1, %c0_i32 : i32
    %1 = arith.extui %0 : i1 to i32
    %c0_i32_0 = arith.constant 0 : i32
    %2 = arith.cmpi ne, %1, %c0_i32_0 : i32
    scf.if %2 {
      %cst_9 = arith.constant 0.000000e+00 : f32
      %11 = vector.broadcast %cst_9 : f32 to vector<2x32xf32>
      %c0_10 = arith.constant 0 : index
      %c0_11 = arith.constant 0 : index
      %12 = vector.load %arg8[%c0_10, %c0_11] : memref<2x32xf32, #tpu.memory_space<vmem>>, vector<2x32xf32>
      tpu.vector_store %arg8[%c0_10, %c0_11], %11 {strides = array<i32>} : memref<2x32xf32, #tpu.memory_space<vmem>>, vector<2x32xf32>,
    } else {
    }
    %c0 = arith.constant 0 : index
    %c0_1 = arith.constant 0 : index
    %3 = vector.load %arg8[%c0, %c0_1] : memref<2x32xf32, #tpu.memory_space<vmem>>, vector<2x32xf32>
    %c0_2 = arith.constant 0 : index
    %c0_3 = arith.constant 0 : index
    %c0_4 = arith.constant 0 : index
    %4 = vector.load %arg2[%c0_2, %c0_3, %c0_4] : memref<2x32x256xf32, #tpu.memory_space<vmem>>, vector<2x32x256xf32>
    %cst = arith.constant dense<0.000000e+00> : vector<2x32xf32>
    %5 = vector.multi_reduction <add>, %4, %cst [2] : vector<2x32x256xf32> to vector<2x32xf32>
    %6 = arith.addf %3, %5 : vector<2x32xf32>
    %c0_5 = arith.constant 0 : index
    %c0_6 = arith.constant 0 : index
    %7 = vector.load %arg8[%c0_5, %c0_6] : memref<2x32xf32, #tpu.memory_space<vmem>>, vector<2x32xf32>
    tpu.vector_store %arg8[%c0_5, %c0_6], %6 {strides = array<i32>} : memref<2x32xf32, #tpu.memory_space<vmem>>, vector<2x32xf32>,
    %c0_i32_7 = arith.constant 0 : i32
    %8 = arith.cmpi eq, %arg1, %c0_i32_7 : i32
    %9 = arith.extui %8 : i1 to i32
    %c0_i32_8 = arith.constant 0 : i32
    %10 = arith.cmpi ne, %9, %c0_i32_8 : i32
    scf.if %10 {
      %c0_9 = arith.constant 0 : index
      %c0_10 = arith.constant 0 : index
      %11 = vector.load %arg8[%c0_9, %c0_10] : memref<2x32xf32, #tpu.memory_space<vmem>>, vector<2x32xf32>
      %cst_11 = arith.constant 3.906250e-03 : f32
      %12 = vector.broadcast %cst_11 : f32 to vector<2x32xf32>
      %13 = arith.mulf %11, %12 : vector<2x32xf32>
      %c0_12 = arith.constant 0 : index
      %c0_13 = arith.constant 0 : index
      %14 = vector.load %arg3[%c0_12, %c0_13] : memref<32x16xf32, #tpu.memory_space<vmem>>, vector<32x16xf32>
      %cst_14 = arith.constant dense<0.000000e+00> : vector<2x16xf32>
      %15 = tpu.matmul %13, %14, %cst_14 {dimension_numbers = #tpu.dot_dimension_numbers<[1], [0], [0], [1], [0, 0, 1, 1], [], []>} : vector<2x32xf32>, vector<32x16xf32>, vector<2x16xf32> -> vector<2x16xf32>
      %c0_15 = arith.constant 0 : index
      %c0_16 = arith.constant 0 : index
      %16 = vector.load %arg4[%c0_15, %c0_16] : memref<1x16xf32, #tpu.memory_space<vmem>>, vector<1x16xf32>
      %17 = vector.broadcast %16 : vector<1x16xf32> to vector<2x16xf32>
      %18 = arith.addf %15, %17 : vector<2x16xf32>
      %cst_17 = arith.constant 0.000000e+00 : f32
      %19 = vector.broadcast %cst_17 : f32 to vector<2x16xf32>
      %20 = arith.maximumf %18, %19 : vector<2x16xf32>
      %c0_18 = arith.constant 0 : index
      %c0_19 = arith.constant 0 : index
      %21 = vector.load %arg5[%c0_18, %c0_19] : memref<16x32xf32, #tpu.memory_space<vmem>>, vector<16x32xf32>
      %cst_20 = arith.constant dense<0.000000e+00> : vector<2x32xf32>
      %22 = tpu.matmul %20, %21, %cst_20 {dimension_numbers = #tpu.dot_dimension_numbers<[1], [0], [0], [1], [0, 0, 1, 1], [], []>} : vector<2x16xf32>, vector<16x32xf32>, vector<2x32xf32> -> vector<2x32xf32>
      %c0_21 = arith.constant 0 : index
      %c0_22 = arith.constant 0 : index
      %23 = vector.load %arg6[%c0_21, %c0_22] : memref<1x32xf32, #tpu.memory_space<vmem>>, vector<1x32xf32>
      %24 = vector.broadcast %23 : vector<1x32xf32> to vector<2x32xf32>
      %25 = arith.addf %22, %24 : vector<2x32xf32>
      %26 = arith.negf %25 : vector<2x32xf32>
      %27 = math.exp %26 : vector<2x32xf32>
      %cst_23 = arith.constant 1.000000e+00 : f32
      %28 = vector.broadcast %cst_23 : f32 to vector<2x32xf32>
      %29 = arith.addf %28, %27 : vector<2x32xf32>
      %30 = arith.divf %28, %29 : vector<2x32xf32>
      %c0_24 = arith.constant 0 : index
      %c0_25 = arith.constant 0 : index
      %31 = vector.load %arg7[%c0_24, %c0_25] : memref<2x32xf32, #tpu.memory_space<vmem>>, vector<2x32xf32>
      tpu.vector_store %arg7[%c0_24, %c0_25], %30 {strides = array<i32>} : memref<2x32xf32, #tpu.memory_space<vmem>>, vector<2x32xf32>,
    } else {
    }
    return
  }
  func.func @transform_0(%arg0: i32, %arg1: i32) -> (i32, i32, i32) {
    %c0_i32 = arith.constant 0 : i32
    %c0_i32_0 = arith.constant 0 : i32
    return %arg0, %c0_i32, %arg1 : i32, i32, i32
  }
  func.func @transform_1(%arg0: i32, %arg1: i32) -> (i32, i32) {
    %c0_i32 = arith.constant 0 : i32
    %c0_i32_0 = arith.constant 0 : i32
    %c0_i32_1 = arith.constant 0 : i32
    return %c0_i32, %c0_i32_0 : i32, i32
  }
  func.func @transform_2(%arg0: i32, %arg1: i32) -> (i32, i32) {
    %c0_i32 = arith.constant 0 : i32
    %c0_i32_0 = arith.constant 0 : i32
    %c0_i32_1 = arith.constant 0 : i32
    return %c0_i32, %c0_i32_0 : i32, i32
  }
  func.func @transform_3(%arg0: i32, %arg1: i32) -> (i32, i32) {
    %c0_i32 = arith.constant 0 : i32
    %c0_i32_0 = arith.constant 0 : i32
    %c0_i32_1 = arith.constant 0 : i32
    return %c0_i32, %c0_i32_0 : i32, i32
  }
  func.func @transform_4(%arg0: i32, %arg1: i32) -> (i32, i32) {
    %c0_i32 = arith.constant 0 : i32
    %c0_i32_0 = arith.constant 0 : i32
    %c0_i32_1 = arith.constant 0 : i32
    return %c0_i32, %c0_i32_0 : i32, i32
  }
  func.func @transform_5(%arg0: i32, %arg1: i32) -> (i32, i32) {
    %c0_i32 = arith.constant 0 : i32
    %c0_i32_0 = arith.constant 0 : i32
    return %arg0, %c0_i32 : i32, i32
  }
}

</mosaic_0001>

<llo_original>
// kernel: tpu_custom_call.1
$region0: #{tpu_custom_call.1}
  #allocation0 [shape = 'u32[]', space=smem, size = 0x4, offset = 0x4, fixed_abs, tag = 'smem constant byte address 0x4 - core index']
  #allocation1 [shape = 'u32[144,128]{1,0:T(1,128)}', space=vmem, size = 0x12000, scoped, tag = 'internal scratch']
  #allocation2 [shape = 'f32[2,32]{1,0:T(2,128)}', space=vmem, size = 0x400, scoped, tag = 'scratch operand']
  %s0 = inlined_call_operand.hbm [shape: f32[2,32,256], index: 0, kind: input, shape index: {}]
  %s1 = inlined_call_operand.vmem [shape: f32[32,16], index: 1, kind: input, shape index: {}]
  %s2 = inlined_call_operand.vmem [shape: f32[1,16], index: 2, kind: input, shape index: {}]
  %s3 = inlined_call_operand.vmem [shape: f32[16,32], index: 3, kind: input, shape index: {}]
  %s4 = inlined_call_operand.vmem [shape: f32[1,32], index: 4, kind: input, shape index: {}]
  %s5 = inlined_call_operand.hbm [shape: f32[2,32], index: 5, kind: output, shape index: {}]
  %s6 = sld [smem:[#allocation0]]
  $region42: #{tpu_custom_call.1} parent=0
    _
  %s8 = ssub.s32 1, %s6
  %s9 = scalar_select 0, %s8, %s6
  $region1: #{tpu_custom_call.1} parent=0
    #allocation3 [shape = 'u8[65536]{0}', space=vmem, size = 0x10000, scoped, tag = 'input window, operand 0, single buffered']
    #allocation4 [shape = 's32[1]{0}', space=sflag, size = 0x4, scoped, tag = 'scoped memory for tpu_custom_call.1']
    #allocation5 [shape = 's32[1]{0}', space=sflag, size = 0x4, scoped, tag = 'scoped memory for tpu_custom_call.1']
    #allocation6 [shape = 'u8[1024]{0}', space=vmem, size = 0x400, scoped, tag = 'output window, operand 0, single buffered']
    %10 = vsyncpa [#allocation4], 0
    %11 = vsyncpa [#allocation5], 0
    // Predicated region
    $region2: #{tpu_custom_call.1} parent=1 // pred_check
      _
    $region3: #{tpu_custom_call.1} parent=1 // pred_check_branch
      %13 = sbr.rel (0) target = $region5
    $region4: #{tpu_custom_call.1} parent=1 // pred_region
      %s15 = ssub.s32 2048, 2048
      %16 = vsyncadd [#allocation4], %s15
      %s17 = sshll.u32 [#allocation3], 4
      %s18 = int_to_ptr.vmem [resolvable:$true] %s17
      %23 = dma.hbm_to_vmem [thread:$0]  %s0, 2048, %s18, [#allocation4], 256, 256, 16
    $region5: #{tpu_custom_call.1} parent=1 // pred_fallthru
      _
    // Predicated region
    $region6: #{tpu_custom_call.1} parent=1 // pred_check
      _
    $region7: #{tpu_custom_call.1} parent=1 // pred_check_branch
      %25 = sbr.rel (0) target = $region9
    $region8: #{tpu_custom_call.1} parent=1 // pred_region
      _
    $region9: #{tpu_custom_call.1} parent=1 // pred_fallthru
      _
    // Predicated region
    $region10: #{tpu_custom_call.1} parent=1 // pred_check
      _
    $region11: #{tpu_custom_call.1} parent=1 // pred_check_branch
      %27 = sbr.rel (0) target = $region13
    $region12: #{tpu_custom_call.1} parent=1 // pred_region
      _
    $region13: #{tpu_custom_call.1} parent=1 // pred_fallthru
      _
    // Predicated region
    $region14: #{tpu_custom_call.1} parent=1 // pred_check
      _
    $region15: #{tpu_custom_call.1} parent=1 // pred_check_branch
      %29 = sbr.rel (0) target = $region17
    $region16: #{tpu_custom_call.1} parent=1 // pred_region
      _
    $region17: #{tpu_custom_call.1} parent=1 // pred_fallthru
      _
    // Predicated region
    $region18: #{tpu_custom_call.1} parent=1 // pred_check
      _
    $region19: #{tpu_custom_call.1} parent=1 // pred_check_branch
      %31 = sbr.rel (0) target = $region21
    $region20: #{tpu_custom_call.1} parent=1 // pred_region
      _
    $region21: #{tpu_custom_call.1} parent=1 // pred_fallthru
      _
    // Predicated region
    $region22: #{tpu_custom_call.1} parent=1 // pred_check
      _
    $region23: #{tpu_custom_call.1} parent=1 // pred_check_branch
      %33 = sbr.rel (0) target = $region25
    $region24: #{tpu_custom_call.1} parent=1 // pred_region
      %34 = dma.done [#allocation4], 2048
    $region25: #{tpu_custom_call.1} parent=1 // pred_fallthru
      _
    %p35 = scmp.eq.s32.totalorder 0, 0
    // Predicated region
    $region26: #{tpu_custom_call.1} parent=1 // pred_check
      %p36 = pneg %p35
    $region27: #{tpu_custom_call.1} parent=1 // pred_check_branch
      %38 = sbr.rel (%p36) target = $region29
    $region28: #{tpu_custom_call.1} parent=1 // pred_region
      %vm39 = vcmask 254976
      %40 = vst.msk [vmem:[#allocation2] sm:$0x3] %vm39, 0.0
    $region29: #{tpu_custom_call.1} parent=1 // pred_fallthru
      _
    %v41 = vld [vmem:[#allocation2] sm:$0x3]
    %v42 = vld [vmem:[#allocation3] sm:$0xff]
    %v43 = vld [vmem:[#allocation3 + $0x8] sm:$0xff]
    %v44 = vld [vmem:[#allocation3 + $0x10] sm:$0xff]
    %v45 = vld [vmem:[#allocation3 + $0x18] sm:$0xff]
    %v46 = vld [vmem:[#allocation3 + $0x20] sm:$0xff]
    %v47 = vld [vmem:[#allocation3 + $0x28] sm:$0xff]
    %v48 = vld [vmem:[#allocation3 + $0x30] sm:$0xff]
    %v49 = vld [vmem:[#allocation3 + $0x38] sm:$0xff]
    %v50 = vld [vmem:[#allocation3 + $0x40] sm:$0xff]
    %v51 = vld [vmem:[#allocation3 + $0x48] sm:$0xff]
    %v52 = vld [vmem:[#allocation3 + $0x50] sm:$0xff]
    %v53 = vld [vmem:[#allocation3 + $0x58] sm:$0xff]
    %v54 = vld [vmem:[#allocation3 + $0x60] sm:$0xff]
    %v55 = vld [vmem:[#allocation3 + $0x68] sm:$0xff]
    %v56 = vld [vmem:[#allocation3 + $0x70] sm:$0xff]
    %v57 = vld [vmem:[#allocation3 + $0x78] sm:$0xff]
    %v58 = vadd.f32 %v42, %v43
    %59 = vadd.xlane.f32.xlu0 %v58
    %v60 = vpop.xlane.xlu0 %59
    %v61 = vadd.f32 %v44, %v45
    %62 = vadd.xlane.f32.xlu0 %v61
    %v63 = vpop.xlane.xlu0 %62
    %v64 = vadd.f32 %v46, %v47
    %65 = vadd.xlane.f32.xlu0 %v64
    %v66 = vpop.xlane.xlu0 %65
    %v67 = vadd.f32 %v48, %v49
    %68 = vadd.xlane.f32.xlu0 %v67
    %v69 = vpop.xlane.xlu0 %68
    %v70 = vadd.f32 %v50, %v51
    %71 = vadd.xlane.f32.xlu0 %v70
    %v72 = vpop.xlane.xlu0 %71
    %v73 = vadd.f32 %v52, %v53
    %74 = vadd.xlane.f32.xlu0 %v73
    %v75 = vpop.xlane.xlu0 %74
    %v76 = vadd.f32 %v54, %v55
    %77 = vadd.xlane.f32.xlu0 %v76
    %v78 = vpop.xlane.xlu0 %77
    %v79 = vadd.f32 %v56, %v57
    %80 = vadd.xlane.f32.xlu0 %v79
    %v81 = vpop.xlane.xlu0 %80
    %v90 = vlaneseq
    %v91 = vand.u32 %v90, 127
    %v92 = vlaneseq
    %v93 = vshrl.u32 %v92, 7
    %v94 = vsub.s32 %v91, %v93
    %v95 = vrot.slane %v60, %v94
    %v96 = vadd.s32 %v91, 4294967288
    %v97 = vlaneseq
    %v98 = vshrl.u32 %v97, 7
    %v99 = vsub.s32 %v96, %v98
    %v100 = vrot.slane %v63, %v99
    %vm101 = vcmask 130112
    %v102 = vsel %vm101, %v100, %v95
    %v103 = vadd.s32 %v91, 4294967280
    %v104 = vlaneseq
    %v105 = vshrl.u32 %v104, 7
    %v106 = vsub.s32 %v103, %v105
    %v107 = vrot.slane %v66, %v106
    %vm108 = vcmask 195712
    %v109 = vsel %vm108, %v107, %v102
    %v110 = vadd.s32 %v91, 4294967272
    %v111 = vlaneseq
    %v112 = vshrl.u32 %v111, 7
    %v113 = vsub.s32 %v110, %v112
    %v114 = vrot.slane %v69, %v113
    %vm115 = vcmask 261312
    %v116 = vsel %vm115, %v114, %v109
    %v117 = vlaneseq
    %v118 = vshrl.u32 %v117, 7
    %v119 = vsub.s32 %v91, %v118
    %v120 = vrot.slane %v72, %v119
    %v121 = vlaneseq
    %v122 = vshrl.u32 %v121, 7
    %v123 = vsub.s32 %v96, %v122
    %v124 = vrot.slane %v75, %v123
    %v125 = vsel %vm101, %v124, %v120
    %v126 = vlaneseq
    %v127 = vshrl.u32 %v126, 7
    %v128 = vsub.s32 %v103, %v127
    %v129 = vrot.slane %v78, %v128
    %v130 = vsel %vm108, %v129, %v125
    %v131 = vlaneseq
    %v132 = vshrl.u32 %v131, 7
    %v133 = vsub.s32 %v110, %v132
    %v134 = vrot.slane %v81, %v133
    %v135 = vsel %vm115, %v134, %v130
    %vm136 = vcmask 1041409
    %v137 = vsel %vm136, %v135, %v116
    %v139 = vadd.f32 %v41, %v137
    %vm140 = vcmask 254976
    %141 = vst.msk [vmem:[#allocation2] sm:$0x3] %vm140, %v139
    // Predicated region
    $region30: #{tpu_custom_call.1} parent=1 // pred_check
      %p142 = pneg %p35
    $region31: #{tpu_custom_call.1} parent=1 // pred_check_branch
      %144 = sbr.rel (%p142) target = $region33
    $region32: #{tpu_custom_call.1} parent=1 // pred_region
      %v145 = vld [vmem:[#allocation2] sm:$0x3]
      %v146 = vmul.f32 %v145, 0.00390625
      %v147 = vld [vmem:[%s1] sm:$0xff]
      %v148 = vld [vmem:[%s1 + $0x8] sm:$0xff]
      %v149 = vld [vmem:[%s1 + $0x10] sm:$0xff]
      %v150 = vld [vmem:[%s1 + $0x18] sm:$0xff]
      %v151 = vld [vmem:[%s2] sm:$0x1]
      %v153 = vlaneseq
      %v154 = vshrl.u32 %v153, 7
      %v155 = vsub.s32 0, %v154
      %v156 = vrot.slane %v151, %v155
      %vm158 = vcmask 261120
      %v160 = vsel %vm158, %v146, 0
      %162 = vmatprep.subr.mxu0 0.0
      %163 = vmatpush1.msra.mxu0 0.0
      %164 = vmatprep.subr.mxu0 0.0
      %165 = vmatpush1.msra.mxu0 0.0
      %166 = vmatprep.subr.mxu0 0.0
      %167 = vmatpush1.msra.mxu0 0.0
      %168 = vmatprep.subr.mxu0 0.0
      %169 = vmatpush1.msra.mxu0 0.0
      %170 = vmatprep.subr.mxu0 0.0
      %171 = vmatpush1.msra.mxu0 0.0
      %172 = vmatprep.subr.mxu0 0.0
      %173 = vmatpush1.msra.mxu0 0.0
      %174 = vmatprep.subr.mxu0 0.0
      %175 = vmatpush1.msra.mxu0 0.0
      %176 = vmatprep.subr.mxu0 0.0
      %177 = vmatpush1.msra.mxu0 0.0
      %178 = vmatprep.subr.mxu0 0.0
      %179 = vmatpush1.msra.mxu0 0.0
      %180 = vmatprep.subr.mxu0 0.0
      %181 = vmatpush1.msra.mxu0 0.0
      %182 = vmatprep.subr.mxu0 0.0
      %183 = vmatpush1.msra.mxu0 0.0
      %184 = vmatprep.subr.mxu0 0.0
      %185 = vmatpush1.msra.mxu0 0.0
      %186 = vmatprep.subr.mxu0 0.0
      %187 = vmatpush1.msra.mxu0 %v150
      %188 = vmatprep.subr.mxu0 0.0
      %189 = vmatpush1.msra.mxu0 %v149
      %190 = vmatprep.subr.mxu0 0.0
      %191 = vmatpush1.msra.mxu0 %v148
      %192 = vmatprep.subr.mxu0 0.0
      %193 = vmatpush1.msra.mxu0 %v147
      %194 = vmatprep.subr.mxu0 0.0
      %195 = vmatpush2.msra.mxu0 0.0
      %196 = vmatprep.subr.mxu0 0.0
      %197 = vmatpush2.msra.mxu0 0.0
      %198 = vmatprep.subr.mxu0 0.0
      %199 = vmatpush2.msra.mxu0 0.0
      %200 = vmatprep.subr.mxu0 0.0
      %201 = vmatpush2.msra.mxu0 0.0
      %202 = vmatprep.subr.mxu0 0.0
      %203 = vmatpush2.msra.mxu0 0.0
      %204 = vmatprep.subr.mxu0 0.0
      %205 = vmatpush2.msra.mxu0 0.0
      %206 = vmatprep.subr.mxu0 0.0
      %207 = vmatpush2.msra.mxu0 0.0
      %208 = vmatprep.subr.mxu0 0.0
      %209 = vmatpush2.msra.mxu0 0.0
      %210 = vmatprep.subr.mxu0 0.0
      %211 = vmatpush2.msra.mxu0 0.0
      %212 = vmatprep.subr.mxu0 0.0
      %213 = vmatpush2.msra.mxu0 0.0
      %214 = vmatprep.subr.mxu0 0.0
      %215 = vmatpush2.msra.mxu0 0.0
      %216 = vmatprep.subr.mxu0 0.0
      %217 = vmatpush2.msra.mxu0 0.0
      %218 = vmatprep.subr.mxu0 0.0
      %219 = vmatpush2.msra.mxu0 0.0
      %220 = vmatprep.subr.mxu0 0.0
      %221 = vmatpush2.msra.mxu0 0.0
      %222 = vmatprep.subr.mxu0 0.0
      %223 = vmatpush2.msra.mxu0 0.0
      %224 = vmatprep.subr.mxu0 0.0
      %225 = vmatpush2.msra.mxu0 0.0
      %226 = vmatprep.mubr.f32.mxu0 0.0
      %227 = vmatmul.mubr.f32.gmra.mxu0 %v160
      %v228 = vpop.f32.mrf.mxu0
      %v229 = vadd.f32 %v156, %v228
      %v230 = vpop.f32.mrf.mxu0
      %231 = vdwg.mxu0
      %v232 = vmax.f32 %v229, 0.0
      %v233 = vld [vmem:[%s3] sm:$0xff]
      %v234 = vld [vmem:[%s3 + $0x8] sm:$0xff]
      %v235 = vld [vmem:[%s4] sm:$0x1]
      %v237 = vlaneseq
      %v238 = vshrl.u32 %v237, 7
      %v239 = vsub.s32 0, %v238
      %v240 = vrot.slane %v235, %v239
      %vm242 = vcmask 130048
      %v244 = vsel %vm242, %v232, 0
      %246 = vmatprep.subr.mxu0 0.0
      %247 = vmatpush1.msra.mxu0 0.0
      %248 = vmatprep.subr.mxu0 0.0
      %249 = vmatpush1.msra.mxu0 0.0
      %250 = vmatprep.subr.mxu0 0.0
      %251 = vmatpush1.msra.mxu0 0.0
      %252 = vmatprep.subr.mxu0 0.0
      %253 = vmatpush1.msra.mxu0 0.0
      %254 = vmatprep.subr.mxu0 0.0
      %255 = vmatpush1.msra.mxu0 0.0
      %256 = vmatprep.subr.mxu0 0.0
      %257 = vmatpush1.msra.mxu0 0.0
      %258 = vmatprep.subr.mxu0 0.0
      %259 = vmatpush1.msra.mxu0 0.0
      %260 = vmatprep.subr.mxu0 0.0
      %261 = vmatpush1.msra.mxu0 0.0
      %262 = vmatprep.subr.mxu0 0.0
      %263 = vmatpush1.msra.mxu0 0.0
      %264 = vmatprep.subr.mxu0 0.0
      %265 = vmatpush1.msra.mxu0 0.0
      %266 = vmatprep.subr.mxu0 0.0
      %267 = vmatpush1.msra.mxu0 0.0
      %268 = vmatprep.subr.mxu0 0.0
      %269 = vmatpush1.msra.mxu0 0.0
      %270 = vmatprep.subr.mxu0 0.0
      %271 = vmatpush1.msra.mxu0 0.0
      %272 = vmatprep.subr.mxu0 0.0
      %273 = vmatpush1.msra.mxu0 0.0
      %274 = vmatprep.subr.mxu0 0.0
      %275 = vmatpush1.msra.mxu0 %v234
      %276 = vmatprep.subr.mxu0 0.0
      %277 = vmatpush1.msra.mxu0 %v233
      %278 = vmatprep.subr.mxu0 0.0
      %279 = vmatpush2.msra.mxu0 0.0
      %280 = vmatprep.subr.mxu0 0.0
      %281 = vmatpush2.msra.mxu0 0.0
      %282 = vmatprep.subr.mxu0 0.0
      %283 = vmatpush2.msra.mxu0 0.0
      %284 = vmatprep.subr.mxu0 0.0
      %285 = vmatpush2.msra.mxu0 0.0
      %286 = vmatprep.subr.mxu0 0.0
      %287 = vmatpush2.msra.mxu0 0.0
      %288 = vmatprep.subr.mxu0 0.0
      %289 = vmatpush2.msra.mxu0 0.0
      %290 = vmatprep.subr.mxu0 0.0
      %291 = vmatpush2.msra.mxu0 0.0
      %292 = vmatprep.subr.mxu0 0.0
      %293 = vmatpush2.msra.mxu0 0.0
      %294 = vmatprep.subr.mxu0 0.0
      %295 = vmatpush2.msra.mxu0 0.0
      %296 = vmatprep.subr.mxu0 0.0
      %297 = vmatpush2.msra.mxu0 0.0
      %298 = vmatprep.subr.mxu0 0.0
      %299 = vmatpush2.msra.mxu0 0.0
      %300 = vmatprep.subr.mxu0 0.0
      %301 = vmatpush2.msra.mxu0 0.0
      %302 = vmatprep.subr.mxu0 0.0
      %303 = vmatpush2.msra.mxu0 0.0
      %304 = vmatprep.subr.mxu0 0.0
      %305 = vmatpush2.msra.mxu0 0.0
      %306 = vmatprep.subr.mxu0 0.0
      %307 = vmatpush2.msra.mxu0 0.0
      %308 = vmatprep.subr.mxu0 0.0
      %309 = vmatpush2.msra.mxu0 0.0
      %310 = vmatprep.mubr.f32.mxu0 0.0
      %311 = vmatmul.mubr.f32.gmra.mxu0 %v244
      %v312 = vpop.f32.mrf.mxu0
      %v313 = vadd.f32 %v240, %v312
      %v314 = vpop.f32.mrf.mxu0
      %315 = vdwg.mxu0
      %v316 = vxor.u32 %v313, 2147483648
      %v317 = vmul.f32 %v316, 1.442695
      %v318 = vpow.pop %v317
      %v319 = vadd.f32 %v318, 1.0
      %v320 = vrcp.pop %v319
      %v321 = vmul.f32 1.0, %v320
      %322 = vst.msk [vmem:[#allocation6] sm:$0x3] %vm140, %v321
    $region33: #{tpu_custom_call.1} parent=1 // pred_fallthru
      _
    // Predicated region
    $region34: #{tpu_custom_call.1} parent=1 // pred_check
      _
    $region35: #{tpu_custom_call.1} parent=1 // pred_check_branch
      %324 = sbr.rel (0) target = $region37
    $region36: #{tpu_custom_call.1} parent=1 // pred_region
      %s326 = ssub.s32 32, 32
      %327 = vsyncadd [#allocation5], %s326
      %s329 = sshll.u32 [#allocation6], 4
      %s330 = int_to_ptr.vmem [resolvable:$true] %s329
      %332 = dma.vmem_to_hbm [thread:$0]  %s330, 32, %s5, [#allocation5]
    $region37: #{tpu_custom_call.1} parent=1 // pred_fallthru
      _
    // Predicated region
    $region38: #{tpu_custom_call.1} parent=1 // pred_check
      _
    $region39: #{tpu_custom_call.1} parent=1 // pred_check_branch
      %334 = sbr.rel (0) target = $region41
    $region40: #{tpu_custom_call.1} parent=1 // pred_region
      %335 = dma.done [#allocation5], 32
    $region41: #{tpu_custom_call.1} parent=1 // pred_fallthru
      _
    %336 = vsyncpa [#allocation4], 1
    %337 = vsyncpa [#allocation5], 1

</llo_original>
